<compile_context>
chip_gen: v6e
topology: v6e:2x2x1
jax: 0.10.0
libtpu: 0.0.40
codegen_flags: <defaults>
</compile_context>

<pallas_src>
import jax
import jax.numpy as jnp
from jax.experimental import pallas as pl
from jax.experimental.pallas import tpu as pltpu

HID = 64        # logical hidden size (matches the PyTorch module)
HID_PAD = 128   # lane-padded hidden size
OUT_PAD = 128   # lane-padded action dim (weights only; output is un-padded)


def _round_up(x, m):
    return ((x + m - 1) // m) * m


def qnetwork_kernel(x_ref, w1_ref, w23_ref, b_ref, o_ref):
    """relu(x@W1+b1) -> relu(.@W2+b2) -> .@W3+b3 on one batch tile (all VMEM)."""
    x = x_ref[...]                                  # (TB, S) bf16, pre-cast in wrapper
    b = b_ref[...]                                  # (3, HID_PAD) f32 biases
    w2 = w23_ref[:, :HID_PAD]                       # (HID_PAD, HID_PAD) bf16
    w3 = w23_ref[:, HID_PAD:]                       # (HID_PAD, OUT_PAD) bf16

    h1 = jnp.dot(x, w1_ref[...], preferred_element_type=jnp.float32) + b[0:1, :]
    h1 = jnp.maximum(h1, 0.0)                       # f32 ReLU (v5e-safe)

    h2 = jnp.dot(h1.astype(jnp.bfloat16), w2,
                 preferred_element_type=jnp.float32) + b[1:2, :]
    h2 = jnp.maximum(h2, 0.0)

    q = jnp.dot(h2.astype(jnp.bfloat16), w3,
                preferred_element_type=jnp.float32) + b[2:3, :]

    na = o_ref.shape[-1]                            # real action_size (static)
    o_ref[...] = q[:, :na].astype(o_ref.dtype)      # small, non-padded writeback


def qnetwork_forward(state, params, action_size, *, block_b=1024):
    """Fused QNetwork forward.

    state : (B, state_size) f32 or bf16
    params: dict with
        w1  : (state_size, HID_PAD) bf16
        w23 : (HID_PAD, HID_PAD + OUT_PAD) bf16  (W2 || W3, zero padded)
        b   : (3, HID_PAD) f32                   (b1; b2; b3, zero padded)
    returns: (B, action_size) f32 Q-values
    """
    w1, w23, b = params["w1"], params["w23"], params["b"]
    B, S = state.shape

    # Stream activations as bf16 (MXU operand dtype) -> half the input DMA.
    x = state if state.dtype == jnp.bfloat16 else state.astype(jnp.bfloat16)

    # Big tile to amortize per-step overhead, but keep >= 2 grid steps so both
    # v7x TensorCores are used; multiple of 16 rows for bf16 sublane packing.
    TB = max(16, min(block_b, _round_up(pl.cdiv(B, 2), 16)))
    nb = pl.cdiv(B, TB)
    # NOTE: if block_b is pushed past ~2048 on v5e, add
    # vmem_limit_bytes=... to CompilerParams; unnecessary at the default.

    flops = 2 * B * (S * HID_PAD + HID_PAD * HID_PAD + HID_PAD * OUT_PAD)
    bytes_accessed = (x.size * 2 + w1.size * 2 + w23.size * 2 + b.size * 4
                      + B * action_size * 4)

    out = pl.pallas_call(
        qnetwork_kernel,
        out_shape=jax.ShapeDtypeStruct((B, action_size), jnp.float32),
        grid=(nb,),
        in_specs=[
            pl.BlockSpec((TB, S), lambda i: (i, 0)),                       # streamed bf16 activations
            pl.BlockSpec((S, HID_PAD), lambda i: (0, 0)),                  # VMEM-resident W1
            pl.BlockSpec((HID_PAD, HID_PAD + OUT_PAD), lambda i: (0, 0)),  # W2||W3 resident
            pl.BlockSpec((3, HID_PAD), lambda i: (0, 0)),                  # packed biases
        ],
        # Last dim == full array dim (action_size), so no padded 128-lane slab
        # is written back and no post-kernel slice is needed.
        out_specs=pl.BlockSpec((TB, action_size), lambda i: (i, 0)),
        compiler_params=pltpu.CompilerParams(
            dimension_semantics=("parallel",)),
        cost_estimate=pl.CostEstimate(flops=flops, transcendentals=0,
                                      bytes_accessed=bytes_accessed),
    )(x, w1, w23, b)

    return out


def init_qnetwork_params(key, state_size, action_size, hidden=HID):
    """PyTorch nn.Linear default init (U(+-1/sqrt(fan_in)) on the *logical*
    fan_in), then zero-pad feature dims to lane width and pack/concat."""
    keys = jax.random.split(key, 6)

    def linear(kw, kb, fan_in, fan_out, pad_out):
        bound = 1.0 / jnp.sqrt(jnp.float32(fan_in))
        w = jax.random.uniform(kw, (fan_in, fan_out), jnp.float32, -bound, bound)
        bias = jax.random.uniform(kb, (fan_out,), jnp.float32, -bound, bound)
        w = jnp.pad(w, ((0, 0), (0, pad_out - fan_out)))
        bias = jnp.pad(bias, (0, pad_out - fan_out))
        return w, bias

    w1, b1 = linear(keys[0], keys[1], state_size, hidden, HID_PAD)
    w2, b2 = linear(keys[2], keys[3], hidden, hidden, HID_PAD)
    w3, b3 = linear(keys[4], keys[5], hidden, action_size, OUT_PAD)

    # Pad the contraction (row) dims of W2/W3 up to HID_PAD with zeros.
    w2 = jnp.pad(w2, ((0, HID_PAD - hidden), (0, 0)))
    w3 = jnp.pad(w3, ((0, HID_PAD - hidden), (0, 0)))

    w23 = jnp.concatenate([w2, w3], axis=1)          # (HID_PAD, HID_PAD+OUT_PAD)
    b = jnp.stack([b1, b2, b3], axis=0)              # (3, HID_PAD)

    return {"w1": w1.astype(jnp.bfloat16),
            "w23": w23.astype(jnp.bfloat16),
            "b": b.astype(jnp.float32)}


def qnetwork_ref(state, params, action_size):
    """Pure-JAX reference using the same bf16-operand / f32-accumulate math."""
    w1, w23, b = params["w1"], params["w23"], params["b"]
    x = state.astype(jnp.bfloat16)
    h1 = jnp.maximum(jnp.dot(x, w1, preferred_element_type=jnp.float32) + b[0], 0.0)
    h2 = jnp.maximum(jnp.dot(h1.astype(jnp.bfloat16), w23[:, :HID_PAD],
                             preferred_element_type=jnp.float32) + b[1], 0.0)
    out = jnp.dot(h2.astype(jnp.bfloat16), w23[:, HID_PAD:],
                  preferred_element_type=jnp.float32) + b[2]
    return out[:, :action_size]


if __name__ == "__main__":
    key = jax.random.PRNGKey(0)
    k_params, k_state = jax.random.split(key)

    batch = 256          # -> TB=128, nb=2 (both v7x cores get a tile)
    state_size = 8
    action_size = 4

    params = init_qnetwork_params(k_params, state_size, action_size)
    state = jax.random.normal(k_state, (batch, state_size), jnp.float32)

    out = jax.block_until_ready(qnetwork_forward(state, params, action_size))
    ref = qnetwork_ref(state, params, action_size)

    assert out.shape == (batch, action_size), out.shape
    assert jnp.allclose(out, ref, atol=1e-2, rtol=1e-2), \
        float(jnp.max(jnp.abs(out - ref)))

    print("KERNEL_OK")
</pallas_src>

<mosaic_0001>
module attributes {stable_mosaic.version = 11 : i64} {
  func.func @qnetwork_kernel(%arg0: i32, %arg1: memref<128x8xbf16, #tpu.memory_space<vmem>>, %arg2: memref<8x128xbf16, #tpu.memory_space<vmem>>, %arg3: memref<128x256xbf16, #tpu.memory_space<vmem>>, %arg4: memref<3x128xf32, #tpu.memory_space<vmem>>, %arg5: memref<128x4xf32, #tpu.memory_space<vmem>>) attributes {dimension_semantics = [#tpu.dimension_semantics<parallel>], iteration_bounds = array<i64: 2>, scalar_prefetch = 0 : i64, scratch_operands = 0 : i64, tpu.core_type = #tpu.core_type<tc>, window_params = [{transform_indices = @transform_0, window_bounds = array<i64: 128, 8>}, {pipeline_mode = #tpu.pipeline_mode<synchronous>, transform_indices = @transform_1, window_bounds = array<i64: 8, 128>}, {pipeline_mode = #tpu.pipeline_mode<synchronous>, transform_indices = @transform_2, window_bounds = array<i64: 128, 256>}, {pipeline_mode = #tpu.pipeline_mode<synchronous>, transform_indices = @transform_3, window_bounds = array<i64: 3, 128>}, {transform_indices = @transform_4, window_bounds = array<i64: 128, 4>}]} {
    %c0 = arith.constant 0 : index
    %c0_0 = arith.constant 0 : index
    %0 = vector.load %arg1[%c0, %c0_0] : memref<128x8xbf16, #tpu.memory_space<vmem>>, vector<128x8xbf16>
    %c0_1 = arith.constant 0 : index
    %c0_2 = arith.constant 0 : index
    %1 = vector.load %arg4[%c0_1, %c0_2] : memref<3x128xf32, #tpu.memory_space<vmem>>, vector<3x128xf32>
    %c0_3 = arith.constant 0 : index
    %c0_4 = arith.constant 0 : index
    %2 = vector.load %arg3[%c0_3, %c0_4] : memref<128x256xbf16, #tpu.memory_space<vmem>>, vector<128x128xbf16>
    %c0_5 = arith.constant 0 : index
    %c128 = arith.constant 128 : index
    %3 = vector.load %arg3[%c0_5, %c128] : memref<128x256xbf16, #tpu.memory_space<vmem>>, vector<128x128xbf16>
    %c0_6 = arith.constant 0 : index
    %c0_7 = arith.constant 0 : index
    %4 = vector.load %arg2[%c0_6, %c0_7] : memref<8x128xbf16, #tpu.memory_space<vmem>>, vector<8x128xbf16>
    %cst = arith.constant dense<0.000000e+00> : vector<128x128xf32>
    %5 = tpu.matmul %0, %4, %cst {dimension_numbers = #tpu.dot_dimension_numbers<[1], [0], [0], [1], [0, 0, 1, 1], [], []>} : vector<128x8xbf16>, vector<8x128xbf16>, vector<128x128xf32> -> vector<128x128xf32>
    %6 = vector.extract_strided_slice %1 {offsets = [0, 0], sizes = [1, 128], strides = [1, 1]} : vector<3x128xf32> to vector<1x128xf32>
    %7 = vector.broadcast %6 : vector<1x128xf32> to vector<128x128xf32>
    %8 = arith.addf %5, %7 : vector<128x128xf32>
    %cst_8 = arith.constant 0.000000e+00 : f32
    %9 = vector.broadcast %cst_8 : f32 to vector<128x128xf32>
    %10 = arith.maximumf %8, %9 : vector<128x128xf32>
    %11 = arith.truncf %10 : vector<128x128xf32> to vector<128x128xbf16>
    %cst_9 = arith.constant dense<0.000000e+00> : vector<128x128xf32>
    %12 = tpu.matmul %11, %2, %cst_9 {dimension_numbers = #tpu.dot_dimension_numbers<[1], [0], [0], [1], [0, 0, 1, 1], [], []>} : vector<128x128xbf16>, vector<128x128xbf16>, vector<128x128xf32> -> vector<128x128xf32>
    %13 = vector.extract_strided_slice %1 {offsets = [1, 0], sizes = [1, 128], strides = [1, 1]} : vector<3x128xf32> to vector<1x128xf32>
    %14 = vector.broadcast %13 : vector<1x128xf32> to vector<128x128xf32>
    %15 = arith.addf %12, %14 : vector<128x128xf32>
    %cst_10 = arith.constant 0.000000e+00 : f32
    %16 = vector.broadcast %cst_10 : f32 to vector<128x128xf32>
    %17 = arith.maximumf %15, %16 : vector<128x128xf32>
    %18 = arith.truncf %17 : vector<128x128xf32> to vector<128x128xbf16>
    %cst_11 = arith.constant dense<0.000000e+00> : vector<128x128xf32>
    %19 = tpu.matmul %18, %3, %cst_11 {dimension_numbers = #tpu.dot_dimension_numbers<[1], [0], [0], [1], [0, 0, 1, 1], [], []>} : vector<128x128xbf16>, vector<128x128xbf16>, vector<128x128xf32> -> vector<128x128xf32>
    %20 = vector.extract_strided_slice %1 {offsets = [2, 0], sizes = [1, 128], strides = [1, 1]} : vector<3x128xf32> to vector<1x128xf32>
    %21 = vector.broadcast %20 : vector<1x128xf32> to vector<128x128xf32>
    %22 = arith.addf %19, %21 : vector<128x128xf32>
    %23 = vector.extract_strided_slice %22 {offsets = [0, 0], sizes = [128, 4], strides = [1, 1]} : vector<128x128xf32> to vector<128x4xf32>
    %c0_12 = arith.constant 0 : index
    %c0_13 = arith.constant 0 : index
    %24 = vector.load %arg5[%c0_12, %c0_13] : memref<128x4xf32, #tpu.memory_space<vmem>>, vector<128x4xf32>
    tpu.vector_store %arg5[%c0_12, %c0_13], %23 {strides = array<i32>} : memref<128x4xf32, #tpu.memory_space<vmem>>, vector<128x4xf32>,
    return
  }
  func.func @transform_0(%arg0: i32) -> (i32, i32) {
    %c0_i32 = arith.constant 0 : i32
    %c0_i32_0 = arith.constant 0 : i32
    return %arg0, %c0_i32 : i32, i32
  }
  func.func @transform_1(%arg0: i32) -> (i32, i32) {
    %c0_i32 = arith.constant 0 : i32
    %c0_i32_0 = arith.constant 0 : i32
    %c0_i32_1 = arith.constant 0 : i32
    return %c0_i32, %c0_i32_0 : i32, i32
  }
  func.func @transform_2(%arg0: i32) -> (i32, i32) {
    %c0_i32 = arith.constant 0 : i32
    %c0_i32_0 = arith.constant 0 : i32
    %c0_i32_1 = arith.constant 0 : i32
    return %c0_i32, %c0_i32_0 : i32, i32
  }
  func.func @transform_3(%arg0: i32) -> (i32, i32) {
    %c0_i32 = arith.constant 0 : i32
    %c0_i32_0 = arith.constant 0 : i32
    %c0_i32_1 = arith.constant 0 : i32
    return %c0_i32, %c0_i32_0 : i32, i32
  }
  func.func @transform_4(%arg0: i32) -> (i32, i32) {
    %c0_i32 = arith.constant 0 : i32
    %c0_i32_0 = arith.constant 0 : i32
    return %arg0, %c0_i32 : i32, i32
  }
}

</mosaic_0001>

<llo_original>
// kernel: tpu_custom_call.1
$region0: #{tpu_custom_call.1}
  #allocation0 [shape = 'u32[]', space=smem, size = 0x4, offset = 0x4, fixed_abs, tag = 'smem constant byte address 0x4 - core index']
  #allocation1 [shape = 'u32[144,128]{1,0:T(1,128)}', space=vmem, size = 0x12000, scoped, tag = 'internal scratch']
  %s0 = inlined_call_operand.vmem [shape: bf16[256,8], index: 0, kind: input, shape index: {}]
  %s1 = inlined_call_operand.vmem [shape: bf16[8,128], index: 1, kind: input, shape index: {}]
  %s2 = inlined_call_operand.vmem [shape: bf16[128,256], index: 2, kind: input, shape index: {}]
  %s3 = inlined_call_operand.vmem [shape: f32[3,128], index: 3, kind: input, shape index: {}]
  %s4 = inlined_call_operand.vmem [shape: f32[256,4], index: 4, kind: output, shape index: {}]
  %s5 = sld [smem:[#allocation0]]
  $region49: #{tpu_custom_call.1} parent=0
    _
  %s7 = ssub.s32 1, %s5
  %s8 = scalar_select 0, %s7, %s5
  loop: start=0, step=1, limit=4
  $region2: #{tpu_custom_call.1} parent=0 // loop_pre_header
    _
  $region3: #{tpu_custom_call.1} parent=0 // loop_header
    %s10 = sphi 0, %s14
    %p11 = scmp.ge.s32.totalorder %s10, 4
    %s20 = sphi 0, %s22
    %s23 = sphi 0, %s20
    %s24 = sphi 0, %s23
    %s40 = sphi 0, %s24
    %s44 = sphi 0, %s44
    %s46 = sphi 0, %s44
    %s47 = sphi 0, %s46
    %s61 = sphi 0, %s47
    %s65 = sphi 0, %s65
    %s67 = sphi 0, %s65
    %s68 = sphi 0, %s67
    %s82 = sphi 0, %s68
    %s86 = sphi 0, %s86
    %s88 = sphi 0, %s86
    %s89 = sphi 0, %s88
    %s103 = sphi 0, %s89
    %s109 = sphi 0, %s111
    %s112 = sphi 0, %s109
    %s113 = sphi 0, %s112
    %s129 = sphi 0, %s113
  $region4: #{tpu_custom_call.1} parent=0 // loop_header_branch
    %13 = sbr.rel (%p11) target = $region8
  $region5: #{tpu_custom_call.1} parent=0 // loop_body
    %s15 = ssub.s32 %s10, 1
    %s16 = ssub.s32 %s10, 2
    %s17 = sadd.s32 %s10, 1
    %s18 = ssub.s32 %s10, %s17
    %p19 = scmp.eq.s32.totalorder %s18, 0
    %s21 = sadd.s32 %s20, 1
    %s22 = scalar_select %p19, %s20, %s21
    %p25 = pneg %p19
    %p26 = scmp.eq.s32.totalorder %s10, 1
    %p27 = por %p25, %p26
    %p28 = scmp.ne.s32.totalorder %s20, %s23
    %p29 = scmp.eq.s32.totalorder %s10, 0
    %p30 = por %p28, %p29
    %p31 = scmp.ne.s32.totalorder %s20, %s23
    %p32 = scmp.eq.s32.totalorder %s15, 1
    %p33 = por %p31, %p32
    %p34 = scmp.ne.s32.totalorder %s23, %s24
    %p35 = scmp.eq.s32.totalorder %s15, 0
    %p36 = por %p34, %p35
    %p37 = scmp.ne.s32.totalorder %s23, %s24
    %p38 = scmp.eq.s32.totalorder %s16, 1
    %p39 = por %p37, %p38
    %p41 = scmp.ne.s32.totalorder %s24, %s40
    %p42 = scmp.eq.s32.totalorder %s16, 0
    %p43 = por %p41, %p42
    %s45 = sadd.s32 %s44, 1
    %p48 = scmp.eq.s32.totalorder %s10, 1
    %p49 = scmp.ne.s32.totalorder %s44, %s46
    %p50 = scmp.eq.s32.totalorder %s10, 0
    %p51 = por %p49, %p50
    %p52 = scmp.ne.s32.totalorder %s44, %s46
    %p53 = scmp.eq.s32.totalorder %s15, 1
    %p54 = por %p52, %p53
    %p55 = scmp.ne.s32.totalorder %s46, %s47
    %p56 = scmp.eq.s32.totalorder %s15, 0
    %p57 = por %p55, %p56
    %p58 = scmp.ne.s32.totalorder %s46, %s47
    %p59 = scmp.eq.s32.totalorder %s16, 1
    %p60 = por %p58, %p59
    %p62 = scmp.ne.s32.totalorder %s47, %s61
    %p63 = scmp.eq.s32.totalorder %s16, 0
    %p64 = por %p62, %p63
    %s66 = sadd.s32 %s65, 1
    %p69 = scmp.eq.s32.totalorder %s10, 1
    %p70 = scmp.ne.s32.totalorder %s65, %s67
    %p71 = scmp.eq.s32.totalorder %s10, 0
    %p72 = por %p70, %p71
    %p73 = scmp.ne.s32.totalorder %s65, %s67
    %p74 = scmp.eq.s32.totalorder %s15, 1
    %p75 = por %p73, %p74
    %p76 = scmp.ne.s32.totalorder %s67, %s68
    %p77 = scmp.eq.s32.totalorder %s15, 0
    %p78 = por %p76, %p77
    %p79 = scmp.ne.s32.totalorder %s67, %s68
    %p80 = scmp.eq.s32.totalorder %s16, 1
    %p81 = por %p79, %p80
    %p83 = scmp.ne.s32.totalorder %s68, %s82
    %p84 = scmp.eq.s32.totalorder %s16, 0
    %p85 = por %p83, %p84
    %s87 = sadd.s32 %s86, 1
    %p90 = scmp.eq.s32.totalorder %s10, 1
    %p91 = scmp.ne.s32.totalorder %s86, %s88
    %p92 = scmp.eq.s32.totalorder %s10, 0
    %p93 = por %p91, %p92
    %p94 = scmp.ne.s32.totalorder %s86, %s88
    %p95 = scmp.eq.s32.totalorder %s15, 1
    %p96 = por %p94, %p95
    %p97 = scmp.ne.s32.totalorder %s88, %s89
    %p98 = scmp.eq.s32.totalorder %s15, 0
    %p99 = por %p97, %p98
    %p100 = scmp.ne.s32.totalorder %s88, %s89
    %p101 = scmp.eq.s32.totalorder %s16, 1
    %p102 = por %p100, %p101
    %p104 = scmp.ne.s32.totalorder %s89, %s103
    %p105 = scmp.eq.s32.totalorder %s16, 0
    %p106 = por %p104, %p105
    %s107 = ssub.s32 %s10, %s17
    %p108 = scmp.eq.s32.totalorder %s107, 0
    %s110 = sadd.s32 %s109, 1
    %s111 = scalar_select %p108, %s109, %s110
    %p114 = pneg %p108
    %p115 = scmp.eq.s32.totalorder %s10, 1
    %p116 = por %p114, %p115
    %p117 = scmp.ne.s32.totalorder %s109, %s112
    %p118 = scmp.eq.s32.totalorder %s10, 0
    %p119 = por %p117, %p118
    %p120 = scmp.ne.s32.totalorder %s109, %s112
    %p121 = scmp.eq.s32.totalorder %s15, 1
    %p122 = por %p120, %p121
    %p123 = scmp.ne.s32.totalorder %s112, %s113
    %p124 = scmp.eq.s32.totalorder %s15, 0
    %p125 = por %p123, %p124
    %p126 = scmp.ne.s32.totalorder %s112, %s113
    %p127 = scmp.eq.s32.totalorder %s16, 1
    %p128 = por %p126, %p127
    %p130 = scmp.ne.s32.totalorder %s113, %s129
    %p131 = scmp.eq.s32.totalorder %s16, 0
    %p132 = por %p130, %p131
    %p133 = scmp.le.s32.totalorder 1, %s10
    %p134 = scmp.lt.s32.totalorder %s10, 3
    %p135 = pnand %p133, %p134
    %p136 = pneg %p135
    // Predicated region
    $region9: #{tpu_custom_call.1} parent=5 // pred_check
      _
    $region10: #{tpu_custom_call.1} parent=5 // pred_check_branch
      %138 = sbr.rel (%p135) target = $region12
    $region11: #{tpu_custom_call.1} parent=5 // pred_region
      %s139 = ssub.s32 %s10, 1
      // Predicated region
      $region13: #{tpu_custom_call.1} parent=11 // pred_check
        %p140 = pneg %p57
      $region14: #{tpu_custom_call.1} parent=11 // pred_check_branch
        %142 = sbr.rel (%p140) target = $region16
      $region15: #{tpu_custom_call.1} parent=11 // pred_region
        _
      $region16: #{tpu_custom_call.1} parent=11 // pred_fallthru
        _
      // Predicated region
      $region17: #{tpu_custom_call.1} parent=11 // pred_check
        %p143 = pneg %p78
      $region18: #{tpu_custom_call.1} parent=11 // pred_check_branch
        %145 = sbr.rel (%p143) target = $region20
      $region19: #{tpu_custom_call.1} parent=11 // pred_region
        _
      $region20: #{tpu_custom_call.1} parent=11 // pred_fallthru
        _
      // Predicated region
      $region21: #{tpu_custom_call.1} parent=11 // pred_check
        %p146 = pneg %p99
      $region22: #{tpu_custom_call.1} parent=11 // pred_check_branch
        %148 = sbr.rel (%p146) target = $region24
      $region23: #{tpu_custom_call.1} parent=11 // pred_region
        _
      $region24: #{tpu_custom_call.1} parent=11 // pred_fallthru
        _
    $region12: #{tpu_custom_call.1} parent=5 // pred_fallthru
      _
    %p149 = scmp.lt.s32.totalorder %s10, 2
    // Predicated region
    $region25: #{tpu_custom_call.1} parent=5 // pred_check
      %p150 = pneg %p149
    $region26: #{tpu_custom_call.1} parent=5 // pred_check_branch
      %152 = sbr.rel (%p150) target = $region28
    $region27: #{tpu_custom_call.1} parent=5 // pred_region
      // Predicated region
      $region29: #{tpu_custom_call.1} parent=27 // pred_check
        %p153 = pneg %p30
      $region30: #{tpu_custom_call.1} parent=27 // pred_check_branch
        %155 = sbr.rel (%p153) target = $region32
      $region31: #{tpu_custom_call.1} parent=27 // pred_region
        %s156 = smul.u32 16, %s10
        %p157 = scmp.lt.s32.totalorder %s156, 31
        %s158 = scalar_select %p157, %s156, 31
        %s159 = smul.addr %s158, 4
        %s160 = scalar_lea.vmem %s0, %s159
        %s161 = smul.u32 16, %s10
      $region32: #{tpu_custom_call.1} parent=27 // pred_fallthru
        _
    $region28: #{tpu_custom_call.1} parent=5 // pred_fallthru
      _
    %p162 = scmp.le.s32.totalorder 1, %s10
    %p163 = scmp.lt.s32.totalorder %s10, 3
    %p164 = pnand %p162, %p163
    %p165 = pneg %p164
    // Predicated region
    $region33: #{tpu_custom_call.1} parent=5 // pred_check
      _
    $region34: #{tpu_custom_call.1} parent=5 // pred_check_branch
      %167 = sbr.rel (%p164) target = $region36
    $region35: #{tpu_custom_call.1} parent=5 // pred_region
      %s168 = ssub.s32 %s10, 1
      %s169 = smul.u32 16, %s15
      %p170 = scmp.lt.s32.totalorder %s169, 31
      %s171 = scalar_select %p170, %s169, 31
      %s172 = smul.addr %s171, 4
      %s173 = scalar_lea.vmem %s0, %s172
      %p174 = pneg %p36
      %p175 = pneg %p33
      %p176 = pneg %p57
      %p177 = pneg %p54
      %p178 = pneg %p78
      %p179 = pneg %p75
      %p180 = pneg %p99
      %p181 = pneg %p96
      %p182 = pneg %p125
      %p183 = pneg %p122
      %s184 = smul.u32 16, %s15
      %p185 = scmp.lt.s32.totalorder %s184, 31
      %s186 = scalar_select %p185, %s184, 31
      %s187 = smul.addr %s186, 8
      %s188 = scalar_lea.vmem %s4, %s187
      %s189 = smul.u32 16, %s15
      %p190 = scmp.lt.s32.totalorder %s189, 31
      %s191 = scalar_select %p190, %s189, 31
      %s192 = smul.addr %s191, 4
      %s193 = scalar_lea.vmem %s0, %s192
      %s194 = smul.u32 16, %s15
      %s195 = smul.u32 16, %s15
      %p196 = scmp.lt.s32.totalorder %s195, 31
      %s197 = scalar_select %p196, %s195, 31
      %s198 = smul.addr %s197, 8
      %s199 = scalar_lea.vmem %s4, %s198
      %s200 = smul.u32 16, %s15
      %v202 = vld [vmem:[%s193] sm:$0xf]
      %v203 = vld [vmem:[%s193 + $0x4] sm:$0xf]
      %v204 = vld [vmem:[%s193 + $0x8] sm:$0xf]
      %v205 = vld [vmem:[%s193 + $0xc] sm:$0xf]
      %v206 = vld [vmem:[%s193 + $0x10] sm:$0xf]
      %v207 = vld [vmem:[%s193 + $0x14] sm:$0xf]
      %v208 = vld [vmem:[%s193 + $0x18] sm:$0xf]
      %v209 = vld [vmem:[%s193 + $0x1c] sm:$0xf]
      %v210 = vld [vmem:[%s193 + $0x20] sm:$0xf]
      %v211 = vld [vmem:[%s193 + $0x24] sm:$0xf]
      %v212 = vld [vmem:[%s193 + $0x28] sm:$0xf]
      %v213 = vld [vmem:[%s193 + $0x2c] sm:$0xf]
      %v214 = vld [vmem:[%s193 + $0x30] sm:$0xf]
      %v215 = vld [vmem:[%s193 + $0x34] sm:$0xf]
      %v216 = vld [vmem:[%s193 + $0x38] sm:$0xf]
      %v217 = vld [vmem:[%s193 + $0x3c] sm:$0xf]
      %v218 = vld [vmem:[%s3] sm:$0x7]
      %v219 = vld [vmem:[%s2] sm:$0xf]
      %v220 = vld [vmem:[%s2 + $0x8] sm:$0xf]
      %v221 = vld [vmem:[%s2 + $0x10] sm:$0xf]
      %v222 = vld [vmem:[%s2 + $0x18] sm:$0xf]
      %v223 = vld [vmem:[%s2 + $0x20] sm:$0xf]
      %v224 = vld [vmem:[%s2 + $0x28] sm:$0xf]
      %v225 = vld [vmem:[%s2 + $0x30] sm:$0xf]
      %v226 = vld [vmem:[%s2 + $0x38] sm:$0xf]
      %v227 = vld [vmem:[%s2 + $0x40] sm:$0xf]
      %v228 = vld [vmem:[%s2 + $0x48] sm:$0xf]
      %v229 = vld [vmem:[%s2 + $0x50] sm:$0xf]
      %v230 = vld [vmem:[%s2 + $0x58] sm:$0xf]
      %v231 = vld [vmem:[%s2 + $0x60] sm:$0xf]
      %v232 = vld [vmem:[%s2 + $0x68] sm:$0xf]
      %v233 = vld [vmem:[%s2 + $0x70] sm:$0xf]
      %v234 = vld [vmem:[%s2 + $0x78] sm:$0xf]
      %v235 = vld [vmem:[%s2 + $0x4] sm:$0xf]
      %v236 = vld [vmem:[%s2 + $0xc] sm:$0xf]
      %v237 = vld [vmem:[%s2 + $0x14] sm:$0xf]
      %v238 = vld [vmem:[%s2 + $0x1c] sm:$0xf]
      %v239 = vld [vmem:[%s2 + $0x24] sm:$0xf]
      %v240 = vld [vmem:[%s2 + $0x2c] sm:$0xf]
      %v241 = vld [vmem:[%s2 + $0x34] sm:$0xf]
      %v242 = vld [vmem:[%s2 + $0x3c] sm:$0xf]
      %v243 = vld [vmem:[%s2 + $0x44] sm:$0xf]
      %v244 = vld [vmem:[%s2 + $0x4c] sm:$0xf]
      %v245 = vld [vmem:[%s2 + $0x54] sm:$0xf]
      %v246 = vld [vmem:[%s2 + $0x5c] sm:$0xf]
      %v247 = vld [vmem:[%s2 + $0x64] sm:$0xf]
      %v248 = vld [vmem:[%s2 + $0x6c] sm:$0xf]
      %v249 = vld [vmem:[%s2 + $0x74] sm:$0xf]
      %v250 = vld [vmem:[%s2 + $0x7c] sm:$0xf]
      %v251 = vld [vmem:[%s1] sm:$0xf]
      %v252 = vlaneseq
      %v253 = vshrl.u32 %v252, 7
      %v254 = vsub.s32 0, %v253
      %v255 = vrot.slane %v218, %v254
      %v272 = vunpack.c.l.b16 %v202
      %v273 = vunpack.c.l.b16 %v203
      %v274 = vunpack.c.l.b16 %v204
      %v275 = vunpack.c.l.b16 %v205
      %v276 = vunpack.c.l.b16 %v206
      %v277 = vunpack.c.l.b16 %v207
      %v278 = vunpack.c.l.b16 %v208
      %v279 = vunpack.c.l.b16 %v209
      %v280 = vunpack.c.l.b16 %v210
      %v281 = vunpack.c.l.b16 %v211
      %v282 = vunpack.c.l.b16 %v212
      %v283 = vunpack.c.l.b16 %v213
      %v284 = vunpack.c.l.b16 %v214
      %v285 = vunpack.c.l.b16 %v215
      %v286 = vunpack.c.l.b16 %v216
      %v287 = vunpack.c.l.b16 %v217
      %v288 = vpack.c.b16 %v273, %v272
      %v289 = vpack.c.b16 %v275, %v274
      %v290 = vpack.c.b16 %v277, %v276
      %v291 = vpack.c.b16 %v279, %v278
      %v292 = vpack.c.b16 %v281, %v280
      %v293 = vpack.c.b16 %v283, %v282
      %v294 = vpack.c.b16 %v285, %v284
      %v295 = vpack.c.b16 %v287, %v286
      %vm296 = vcmask 64512
      %v298 = vsel %vm296, %v288, 0
      %v301 = vsel %vm296, %v289, 0
      %v304 = vsel %vm296, %v290, 0
      %v307 = vsel %vm296, %v291, 0
      %v310 = vsel %vm296, %v292, 0
      %v313 = vsel %vm296, %v293, 0
      %v316 = vsel %vm296, %v294, 0
      %v319 = vsel %vm296, %v295, 0
      %vm321 = vcmask 1043456
      %v323 = vsel %vm321, %v251, 0
      %325 = vmatprep.subr.bf16.mxu0 0
      %326 = vmatpush1.bf16.msra.mxu0 0
      %327 = vmatprep.subr.bf16.mxu0 0
      %328 = vmatpush1.bf16.msra.mxu0 0
      %329 = vmatprep.subr.bf16.mxu0 0
      %330 = vmatpush1.bf16.msra.mxu0 0
      %331 = vmatprep.subr.bf16.mxu0 0
      %332 = vmatpush1.bf16.msra.mxu0 0
      %333 = vmatprep.subr.bf16.mxu0 0
      %334 = vmatpush1.bf16.msra.mxu0 0
      %335 = vmatprep.subr.bf16.mxu0 0
      %336 = vmatpush1.bf16.msra.mxu0 0
      %337 = vmatprep.subr.bf16.mxu0 0
      %338 = vmatpush1.bf16.msra.mxu0 0
      %339 = vmatprep.subr.bf16.mxu0 0
      %340 = vmatpush1.bf16.msra.mxu0 %v323
      %341 = vmatprep.subr.bf16.mxu0 0
      %342 = vmatpush2.bf16.msra.mxu0 0
      %343 = vmatprep.subr.bf16.mxu0 0
      %344 = vmatpush2.bf16.msra.mxu0 0
      %345 = vmatprep.subr.bf16.mxu0 0
      %346 = vmatpush2.bf16.msra.mxu0 0
      %347 = vmatprep.subr.bf16.mxu0 0
      %348 = vmatpush2.bf16.msra.mxu0 0
      %349 = vmatprep.subr.bf16.mxu0 0
      %350 = vmatpush2.bf16.msra.mxu0 0
      %351 = vmatprep.subr.bf16.mxu0 0
      %352 = vmatpush2.bf16.msra.mxu0 0
      %353 = vmatprep.subr.bf16.mxu0 0
      %354 = vmatpush2.bf16.msra.mxu0 0
      %355 = vmatprep.subr.bf16.mxu0 0
      %356 = vmatpush2.bf16.msra.mxu0 0
      %357 = vmatprep.mubr.bf16.mxu0 0
      %358 = vmatmul.mubr.bf16.gmra.mxu0 %v298
      %v359 = vpop.f32.mrf.mxu0
      %v360 = vadd.f32 %v255, %v359
      %v361 = vpop.f32.mrf.mxu0
      %v362 = vpop.f32.mrf.mxu0
      %v363 = vadd.f32 %v255, %v362
      %v364 = vpop.f32.mrf.mxu0
      %365 = vmatprep.mubr.bf16.mxu0 0
      %366 = vmatmul.mubr.bf16.gmra.mxu0 %v301
      %v367 = vpop.f32.mrf.mxu0
      %v368 = vadd.f32 %v255, %v367
      %v369 = vpop.f32.mrf.mxu0
      %v370 = vpop.f32.mrf.mxu0
      %v371 = vadd.f32 %v255, %v370
      %v372 = vpop.f32.mrf.mxu0
      %373 = vmatprep.mubr.bf16.mxu0 0
      %374 = vmatmul.mubr.bf16.gmra.mxu0 %v304
      %v375 = vpop.f32.mrf.mxu0
      %v376 = vadd.f32 %v255, %v375
      %v377 = vpop.f32.mrf.mxu0
      %v378 = vpop.f32.mrf.mxu0
      %v379 = vadd.f32 %v255, %v378
      %v380 = vpop.f32.mrf.mxu0
      %381 = vmatprep.mubr.bf16.mxu0 0
      %382 = vmatmul.mubr.bf16.gmra.mxu0 %v307
      %v383 = vpop.f32.mrf.mxu0
      %v384 = vadd.f32 %v255, %v383
      %v385 = vpop.f32.mrf.mxu0
      %v386 = vpop.f32.mrf.mxu0
      %v387 = vadd.f32 %v255, %v386
      %v388 = vpop.f32.mrf.mxu0
      %389 = vmatprep.mubr.bf16.mxu0 0
      %390 = vmatmul.mubr.bf16.gmra.mxu0 %v310
      %v391 = vpop.f32.mrf.mxu0
      %v392 = vadd.f32 %v255, %v391
      %v393 = vpop.f32.mrf.mxu0
      %v394 = vpop.f32.mrf.mxu0
      %v395 = vadd.f32 %v255, %v394
      %v396 = vpop.f32.mrf.mxu0
      %397 = vmatprep.mubr.bf16.mxu0 0
      %398 = vmatmul.mubr.bf16.gmra.mxu0 %v313
      %v399 = vpop.f32.mrf.mxu0
      %v400 = vadd.f32 %v255, %v399
      %v401 = vpop.f32.mrf.mxu0
      %v402 = vpop.f32.mrf.mxu0
      %v403 = vadd.f32 %v255, %v402
      %v404 = vpop.f32.mrf.mxu0
      %405 = vmatprep.mubr.bf16.mxu0 0
      %406 = vmatmul.mubr.bf16.gmra.mxu0 %v316
      %v407 = vpop.f32.mrf.mxu0
      %v408 = vadd.f32 %v255, %v407
      %v409 = vpop.f32.mrf.mxu0
      %v410 = vpop.f32.mrf.mxu0
      %v411 = vadd.f32 %v255, %v410
      %v412 = vpop.f32.mrf.mxu0
      %413 = vmatprep.mubr.bf16.mxu0 0
      %414 = vmatmul.mubr.bf16.gmra.mxu0 %v319
      %v415 = vpop.f32.mrf.mxu0
      %v416 = vadd.f32 %v255, %v415
      %v417 = vpop.f32.mrf.mxu0
      %v418 = vpop.f32.mrf.mxu0
      %v419 = vadd.f32 %v255, %v418
      %v420 = vpop.f32.mrf.mxu0
      %421 = vdwg.mxu0
      %v422 = vmax.f32 %v360, 0.0
      %v423 = vmax.f32 %v363, 0.0
      %v424 = vmax.f32 %v368, 0.0
      %v425 = vmax.f32 %v371, 0.0
      %v426 = vmax.f32 %v376, 0.0
      %v427 = vmax.f32 %v379, 0.0
      %v428 = vmax.f32 %v384, 0.0
      %v429 = vmax.f32 %v387, 0.0
      %v430 = vmax.f32 %v392, 0.0
      %v431 = vmax.f32 %v395, 0.0
      %v432 = vmax.f32 %v400, 0.0
      %v433 = vmax.f32 %v403, 0.0
      %v434 = vmax.f32 %v408, 0.0
      %v435 = vmax.f32 %v411, 0.0
      %v436 = vmax.f32 %v416, 0.0
      %v437 = vmax.f32 %v419, 0.0
      %v438 = vpack.c.bf16 %v423, %v422
      %v439 = vpack.c.bf16 %v425, %v424
      %v440 = vpack.c.bf16 %v427, %v426
      %v441 = vpack.c.bf16 %v429, %v428
      %v442 = vpack.c.bf16 %v431, %v430
      %v443 = vpack.c.bf16 %v433, %v432
      %v444 = vpack.c.bf16 %v435, %v434
      %v445 = vpack.c.bf16 %v437, %v436
      %v446 = vlaneseq
      %v447 = vshrl.u32 %v446, 7
      %v448 = vsub.s32 1, %v447
      %v449 = vrot.slane %v218, %v448
      %v466 = vunpack.c.l.b16 %v219
      %v467 = vunpack.c.l.b16 %v220
      %v468 = vunpack.c.l.b16 %v221
      %v469 = vunpack.c.l.b16 %v222
      %v470 = vunpack.c.l.b16 %v223
      %v471 = vunpack.c.l.b16 %v224
      %v472 = vunpack.c.l.b16 %v225
      %v473 = vunpack.c.l.b16 %v226
      %v474 = vunpack.c.l.b16 %v227
      %v475 = vunpack.c.l.b16 %v228
      %v476 = vunpack.c.l.b16 %v229
      %v477 = vunpack.c.l.b16 %v230
      %v478 = vunpack.c.l.b16 %v231
      %v479 = vunpack.c.l.b16 %v232
      %v480 = vunpack.c.l.b16 %v233
      %v481 = vunpack.c.l.b16 %v234
      %v482 = vpack.c.b16 %v467, %v466
      %v483 = vpack.c.b16 %v469, %v468
      %v484 = vpack.c.b16 %v471, %v470
      %v485 = vpack.c.b16 %v473, %v472
      %v486 = vpack.c.b16 %v475, %v474
      %v487 = vpack.c.b16 %v477, %v476
      %v488 = vpack.c.b16 %v479, %v478
      %v489 = vpack.c.b16 %v481, %v480
      %498 = vmatprep.subr.bf16.mxu0 0
      %499 = vmatpush1.bf16.msra.mxu0 %v489
      %500 = vmatprep.subr.bf16.mxu0 0
      %501 = vmatpush1.bf16.msra.mxu0 %v488
      %502 = vmatprep.subr.bf16.mxu0 0
      %503 = vmatpush1.bf16.msra.mxu0 %v487
      %504 = vmatprep.subr.bf16.mxu0 0
      %505 = vmatpush1.bf16.msra.mxu0 %v486
      %506 = vmatprep.subr.bf16.mxu0 0
      %507 = vmatpush1.bf16.msra.mxu0 %v485
      %508 = vmatprep.subr.bf16.mxu0 0
      %509 = vmatpush1.bf16.msra.mxu0 %v484
      %510 = vmatprep.subr.bf16.mxu0 0
      %511 = vmatpush1.bf16.msra.mxu0 %v483
      %512 = vmatprep.subr.bf16.mxu0 0
      %513 = vmatpush1.bf16.msra.mxu0 %v482
      %514 = vmatprep.subr.bf16.mxu0 0
      %515 = vmatpush2.bf16.msra.mxu0 0
      %516 = vmatprep.subr.bf16.mxu0 0
      %517 = vmatpush2.bf16.msra.mxu0 0
      %518 = vmatprep.subr.bf16.mxu0 0
      %519 = vmatpush2.bf16.msra.mxu0 0
      %520 = vmatprep.subr.bf16.mxu0 0
      %521 = vmatpush2.bf16.msra.mxu0 0
      %522 = vmatprep.subr.bf16.mxu0 0
      %523 = vmatpush2.bf16.msra.mxu0 0
      %524 = vmatprep.subr.bf16.mxu0 0
      %525 = vmatpush2.bf16.msra.mxu0 0
      %526 = vmatprep.subr.bf16.mxu0 0
      %527 = vmatpush2.bf16.msra.mxu0 0
      %528 = vmatprep.subr.bf16.mxu0 0
      %529 = vmatpush2.bf16.msra.mxu0 0
      %530 = vmatprep.mubr.bf16.mxu0 0
      %531 = vmatmul.mubr.bf16.gmra.mxu0 %v438
      %v532 = vpop.f32.mrf.mxu0
      %v533 = vadd.f32 %v449, %v532
      %v534 = vpop.f32.mrf.mxu0
      %v535 = vpop.f32.mrf.mxu0
      %v536 = vadd.f32 %v449, %v535
      %v537 = vpop.f32.mrf.mxu0
      %538 = vmatprep.mubr.bf16.mxu0 0
      %539 = vmatmul.mubr.bf16.gmra.mxu0 %v439
      %v540 = vpop.f32.mrf.mxu0
      %v541 = vadd.f32 %v449, %v540
      %v542 = vpop.f32.mrf.mxu0
      %v543 = vpop.f32.mrf.mxu0
      %v544 = vadd.f32 %v449, %v543
      %v545 = vpop.f32.mrf.mxu0
      %546 = vmatprep.mubr.bf16.mxu0 0
      %547 = vmatmul.mubr.bf16.gmra.mxu0 %v440
      %v548 = vpop.f32.mrf.mxu0
      %v549 = vadd.f32 %v449, %v548
      %v550 = vpop.f32.mrf.mxu0
      %v551 = vpop.f32.mrf.mxu0
      %v552 = vadd.f32 %v449, %v551
      %v553 = vpop.f32.mrf.mxu0
      %554 = vmatprep.mubr.bf16.mxu0 0
      %555 = vmatmul.mubr.bf16.gmra.mxu0 %v441
      %v556 = vpop.f32.mrf.mxu0
      %v557 = vadd.f32 %v449, %v556
      %v558 = vpop.f32.mrf.mxu0
      %v559 = vpop.f32.mrf.mxu0
      %v560 = vadd.f32 %v449, %v559
      %v561 = vpop.f32.mrf.mxu0
      %562 = vmatprep.mubr.bf16.mxu0 0
      %563 = vmatmul.mubr.bf16.gmra.mxu0 %v442
      %v564 = vpop.f32.mrf.mxu0
      %v565 = vadd.f32 %v449, %v564
      %v566 = vpop.f32.mrf.mxu0
      %v567 = vpop.f32.mrf.mxu0
      %v568 = vadd.f32 %v449, %v567
      %v569 = vpop.f32.mrf.mxu0
      %570 = vmatprep.mubr.bf16.mxu0 0
      %571 = vmatmul.mubr.bf16.gmra.mxu0 %v443
      %v572 = vpop.f32.mrf.mxu0
      %v573 = vadd.f32 %v449, %v572
      %v574 = vpop.f32.mrf.mxu0
      %v575 = vpop.f32.mrf.mxu0
      %v576 = vadd.f32 %v449, %v575
      %v577 = vpop.f32.mrf.mxu0
      %578 = vmatprep.mubr.bf16.mxu0 0
      %579 = vmatmul.mubr.bf16.gmra.mxu0 %v444
      %v580 = vpop.f32.mrf.mxu0
      %v581 = vadd.f32 %v449, %v580
      %v582 = vpop.f32.mrf.mxu0
      %v583 = vpop.f32.mrf.mxu0
      %v584 = vadd.f32 %v449, %v583
      %v585 = vpop.f32.mrf.mxu0
      %586 = vmatprep.mubr.bf16.mxu0 0
      %587 = vmatmul.mubr.bf16.gmra.mxu0 %v445
      %v588 = vpop.f32.mrf.mxu0
      %v589 = vadd.f32 %v449, %v588
      %v590 = vpop.f32.mrf.mxu0
      %v591 = vpop.f32.mrf.mxu0
      %v592 = vadd.f32 %v449, %v591
      %v593 = vpop.f32.mrf.mxu0
      %594 = vdwg.mxu0
      %v595 = vmax.f32 %v533, 0.0
      %v596 = vmax.f32 %v536, 0.0
      %v597 = vmax.f32 %v541, 0.0
      %v598 = vmax.f32 %v544, 0.0
      %v599 = vmax.f32 %v549, 0.0
      %v600 = vmax.f32 %v552, 0.0
      %v601 = vmax.f32 %v557, 0.0
      %v602 = vmax.f32 %v560, 0.0
      %v603 = vmax.f32 %v565, 0.0
      %v604 = vmax.f32 %v568, 0.0
      %v605 = vmax.f32 %v573, 0.0
      %v606 = vmax.f32 %v576, 0.0
      %v607 = vmax.f32 %v581, 0.0
      %v608 = vmax.f32 %v584, 0.0
      %v609 = vmax.f32 %v589, 0.0
      %v610 = vmax.f32 %v592, 0.0
      %v611 = vpack.c.bf16 %v596, %v595
      %v612 = vpack.c.bf16 %v598, %v597
      %v613 = vpack.c.bf16 %v600, %v599
      %v614 = vpack.c.bf16 %v602, %v601
      %v615 = vpack.c.bf16 %v604, %v603
      %v616 = vpack.c.bf16 %v606, %v605
      %v617 = vpack.c.bf16 %v608, %v607
      %v618 = vpack.c.bf16 %v610, %v609
      %v619 = vlaneseq
      %v620 = vshrl.u32 %v619, 7
      %v621 = vsub.s32 2, %v620
      %v622 = vrot.slane %v218, %v621
      %v639 = vunpack.c.l.b16 %v235
      %v640 = vunpack.c.l.b16 %v236
      %v641 = vunpack.c.l.b16 %v237
      %v642 = vunpack.c.l.b16 %v238
      %v643 = vunpack.c.l.b16 %v239
      %v644 = vunpack.c.l.b16 %v240
      %v645 = vunpack.c.l.b16 %v241
      %v646 = vunpack.c.l.b16 %v242
      %v647 = vunpack.c.l.b16 %v243
      %v648 = vunpack.c.l.b16 %v244
      %v649 = vunpack.c.l.b16 %v245
      %v650 = vunpack.c.l.b16 %v246
      %v651 = vunpack.c.l.b16 %v247
      %v652 = vunpack.c.l.b16 %v248
      %v653 = vunpack.c.l.b16 %v249
      %v654 = vunpack.c.l.b16 %v250
      %v655 = vpack.c.b16 %v640, %v639
      %v656 = vpack.c.b16 %v642, %v641
      %v657 = vpack.c.b16 %v644, %v643
      %v658 = vpack.c.b16 %v646, %v645
      %v659 = vpack.c.b16 %v648, %v647
      %v660 = vpack.c.b16 %v650, %v649
      %v661 = vpack.c.b16 %v652, %v651
      %v662 = vpack.c.b16 %v654, %v653
      %671 = vmatprep.subr.bf16.mxu0 0
      %672 = vmatpush1.bf16.msra.mxu0 %v662
      %673 = vmatprep.subr.bf16.mxu0 0
      %674 = vmatpush1.bf16.msra.mxu0 %v661
      %675 = vmatprep.subr.bf16.mxu0 0
      %676 = vmatpush1.bf16.msra.mxu0 %v660
      %677 = vmatprep.subr.bf16.mxu0 0
      %678 = vmatpush1.bf16.msra.mxu0 %v659
      %679 = vmatprep.subr.bf16.mxu0 0
      %680 = vmatpush1.bf16.msra.mxu0 %v658
      %681 = vmatprep.subr.bf16.mxu0 0
      %682 = vmatpush1.bf16.msra.mxu0 %v657
      %683 = vmatprep.subr.bf16.mxu0 0
      %684 = vmatpush1.bf16.msra.mxu0 %v656
      %685 = vmatprep.subr.bf16.mxu0 0
      %686 = vmatpush1.bf16.msra.mxu0 %v655
      %687 = vmatprep.subr.bf16.mxu0 0
      %688 = vmatpush2.bf16.msra.mxu0 0
      %689 = vmatprep.subr.bf16.mxu0 0
      %690 = vmatpush2.bf16.msra.mxu0 0
      %691 = vmatprep.subr.bf16.mxu0 0
      %692 = vmatpush2.bf16.msra.mxu0 0
      %693 = vmatprep.subr.bf16.mxu0 0
      %694 = vmatpush2.bf16.msra.mxu0 0
      %695 = vmatprep.subr.bf16.mxu0 0
      %696 = vmatpush2.bf16.msra.mxu0 0
      %697 = vmatprep.subr.bf16.mxu0 0
      %698 = vmatpush2.bf16.msra.mxu0 0
      %699 = vmatprep.subr.bf16.mxu0 0
      %700 = vmatpush2.bf16.msra.mxu0 0
      %701 = vmatprep.subr.bf16.mxu0 0
      %702 = vmatpush2.bf16.msra.mxu0 0
      %703 = vmatprep.mubr.bf16.mxu0 0
      %704 = vmatmul.mubr.bf16.gmra.mxu0 %v611
      %v705 = vpop.f32.mrf.mxu0
      %v706 = vadd.f32 %v622, %v705
      %v707 = vpop.f32.mrf.mxu0
      %v708 = vpop.f32.mrf.mxu0
      %v709 = vadd.f32 %v622, %v708
      %v710 = vpop.f32.mrf.mxu0
      %711 = vmatprep.mubr.bf16.mxu0 0
      %712 = vmatmul.mubr.bf16.gmra.mxu0 %v612
      %v713 = vpop.f32.mrf.mxu0
      %v714 = vadd.f32 %v622, %v713
      %v715 = vpop.f32.mrf.mxu0
      %v716 = vpop.f32.mrf.mxu0
      %v717 = vadd.f32 %v622, %v716
      %v718 = vpop.f32.mrf.mxu0
      %719 = vmatprep.mubr.bf16.mxu0 0
      %720 = vmatmul.mubr.bf16.gmra.mxu0 %v613
      %v721 = vpop.f32.mrf.mxu0
      %v722 = vadd.f32 %v622, %v721
      %v723 = vpop.f32.mrf.mxu0
      %v724 = vpop.f32.mrf.mxu0
      %v725 = vadd.f32 %v622, %v724
      %v726 = vpop.f32.mrf.mxu0
      %727 = vmatprep.mubr.bf16.mxu0 0
      %728 = vmatmul.mubr.bf16.gmra.mxu0 %v614
      %v729 = vpop.f32.mrf.mxu0
      %v730 = vadd.f32 %v622, %v729
      %v731 = vpop.f32.mrf.mxu0
      %v732 = vpop.f32.mrf.mxu0
      %v733 = vadd.f32 %v622, %v732
      %v734 = vpop.f32.mrf.mxu0
      %735 = vmatprep.mubr.bf16.mxu0 0
      %736 = vmatmul.mubr.bf16.gmra.mxu0 %v615
      %v737 = vpop.f32.mrf.mxu0
      %v738 = vadd.f32 %v622, %v737
      %v739 = vpop.f32.mrf.mxu0
      %v740 = vpop.f32.mrf.mxu0
      %v741 = vadd.f32 %v622, %v740
      %v742 = vpop.f32.mrf.mxu0
      %743 = vmatprep.mubr.bf16.mxu0 0
      %744 = vmatmul.mubr.bf16.gmra.mxu0 %v616
      %v745 = vpop.f32.mrf.mxu0
      %v746 = vadd.f32 %v622, %v745
      %v747 = vpop.f32.mrf.mxu0
      %v748 = vpop.f32.mrf.mxu0
      %v749 = vadd.f32 %v622, %v748
      %v750 = vpop.f32.mrf.mxu0
      %751 = vmatprep.mubr.bf16.mxu0 0
      %752 = vmatmul.mubr.bf16.gmra.mxu0 %v617
      %v753 = vpop.f32.mrf.mxu0
      %v754 = vadd.f32 %v622, %v753
      %v755 = vpop.f32.mrf.mxu0
      %v756 = vpop.f32.mrf.mxu0
      %v757 = vadd.f32 %v622, %v756
      %v758 = vpop.f32.mrf.mxu0
      %759 = vmatprep.mubr.bf16.mxu0 0
      %760 = vmatmul.mubr.bf16.gmra.mxu0 %v618
      %v761 = vpop.f32.mrf.mxu0
      %v762 = vadd.f32 %v622, %v761
      %v763 = vpop.f32.mrf.mxu0
      %v764 = vpop.f32.mrf.mxu0
      %v765 = vadd.f32 %v622, %v764
      %v766 = vpop.f32.mrf.mxu0
      %767 = vdwg.mxu0
      %vm768 = vcmask 31744
      %769 = vst.msk [vmem:[%s199] sm:$0xff] %vm768, %v706
      %770 = vst.msk [vmem:[%s199 + $0x8] sm:$0xff] %vm768, %v709
      %771 = vst.msk [vmem:[%s199 + $0x10] sm:$0xff] %vm768, %v714
      %772 = vst.msk [vmem:[%s199 + $0x18] sm:$0xff] %vm768, %v717
      %773 = vst.msk [vmem:[%s199 + $0x20] sm:$0xff] %vm768, %v722
      %774 = vst.msk [vmem:[%s199 + $0x28] sm:$0xff] %vm768, %v725
      %775 = vst.msk [vmem:[%s199 + $0x30] sm:$0xff] %vm768, %v730
      %776 = vst.msk [vmem:[%s199 + $0x38] sm:$0xff] %vm768, %v733
      %777 = vst.msk [vmem:[%s199 + $0x40] sm:$0xff] %vm768, %v738
      %778 = vst.msk [vmem:[%s199 + $0x48] sm:$0xff] %vm768, %v741
      %779 = vst.msk [vmem:[%s199 + $0x50] sm:$0xff] %vm768, %v746
      %780 = vst.msk [vmem:[%s199 + $0x58] sm:$0xff] %vm768, %v749
      %781 = vst.msk [vmem:[%s199 + $0x60] sm:$0xff] %vm768, %v754
      %782 = vst.msk [vmem:[%s199 + $0x68] sm:$0xff] %vm768, %v757
      %783 = vst.msk [vmem:[%s199 + $0x70] sm:$0xff] %vm768, %v762
      %784 = vst.msk [vmem:[%s199 + $0x78] sm:$0xff] %vm768, %v765
      %s785 = smul.u32 16, %s15
      %p786 = scmp.lt.s32.totalorder %s785, 31
      %s787 = scalar_select %p786, %s785, 31
      %s788 = smul.addr %s787, 8
      %s789 = scalar_lea.vmem %s4, %s788
      // Predicated region
      $region37: #{tpu_custom_call.1} parent=35 // pred_check
        %p790 = pneg %p122
      $region38: #{tpu_custom_call.1} parent=35 // pred_check_branch
        %792 = sbr.rel (%p790) target = $region40
      $region39: #{tpu_custom_call.1} parent=35 // pred_region
        %s793 = smul.u32 16, %s15
      $region40: #{tpu_custom_call.1} parent=35 // pred_fallthru
        _
    $region36: #{tpu_custom_call.1} parent=5 // pred_fallthru
      _
    %p794 = scmp.le.s32.totalorder 2, %s10
    // Predicated region
    $region41: #{tpu_custom_call.1} parent=5 // pred_check
      %p795 = pneg %p794
    $region42: #{tpu_custom_call.1} parent=5 // pred_check_branch
      %797 = sbr.rel (%p795) target = $region44
    $region43: #{tpu_custom_call.1} parent=5 // pred_region
      %s798 = ssub.s32 %s10, 2
      // Predicated region
      $region45: #{tpu_custom_call.1} parent=43 // pred_check
        %p799 = pneg %p128
      $region46: #{tpu_custom_call.1} parent=43 // pred_check_branch
        %801 = sbr.rel (%p799) target = $region48
      $region47: #{tpu_custom_call.1} parent=43 // pred_region
        %s802 = smul.u32 16, %s16
        %p803 = scmp.lt.s32.totalorder %s802, 31
        %s804 = scalar_select %p803, %s802, 31
        %s805 = smul.addr %s804, 8
        %s806 = scalar_lea.vmem %s4, %s805
      $region48: #{tpu_custom_call.1} parent=43 // pred_fallthru
        _
    $region44: #{tpu_custom_call.1} parent=5 // pred_fallthru
      _
  $region6: #{tpu_custom_call.1} parent=0 // loop_footer
    %s14 = sadd.s32 1, %s10
  $region7: #{tpu_custom_call.1} parent=0 // loop_footer_branch
    %9 = sbr.rel target = $region3
  $region8: #{tpu_custom_call.1} parent=0 // loop_exit
    _

</llo_original>
